<compile_context>
chip_gen: v5e
topology: v5e:2x2
jax: 0.10.0
libtpu: 0.0.40
codegen_flags: <defaults>
</compile_context>

<pallas_src>
import numpy as np
import jax
import jax.numpy as jnp
from jax.experimental import pallas as pl
from jax.experimental.pallas import tpu as pltpu

_LANE = 128
_GRANULE = 8 * _LANE  # 1024 elements = one (8, 128) f32 tile along the flattened axis


def _build_pe(d_model: int, max_len: int = 5000, dtype=jnp.float32) -> jnp.ndarray:
    """Sinusoidal PE table (max_len, d_model), matching PyTorch; cast to model dtype once."""
    position = np.arange(0, max_len, dtype=np.float32)[:, None]
    div_term = np.exp(np.arange(0, d_model, 2, dtype=np.float32)
                      * (-np.log(10000.0) / d_model))
    pe = np.zeros((max_len, d_model), dtype=np.float32)
    pe[:, 0::2] = np.sin(position * div_term)
    if d_model % 2 == 0:
        pe[:, 1::2] = np.cos(position * div_term)
    else:
        pe[:, 1::2] = np.cos(position * div_term[:-1])
    return jnp.asarray(pe, dtype=dtype)


def _add_pe_kernel(x_ref, pe_ref, o_ref):
    # x_ref: (B, tf), pe_ref: (1, tf) -> broadcast add over the batch rows.
    # If pe is kept f32 while x is bf16, the add happens in f32 and casts back (free: mem-bound).
    o_ref[...] = (x_ref[...] + pe_ref[...]).astype(o_ref.dtype)


def _vmem_capacity_bytes() -> int:
    try:
        return int(pltpu.get_tpu_info().vmem_capacity_bytes)
    except Exception:
        return 64 * 1024 * 1024  # conservative: v7x per-TensorCore VMEM


def _choose_flat_tile(flat_len: int, batch: int, itemsize: int, vmem_cap: int) -> int:
    """Tile along the flattened S*D axis: lane-aligned, sized against the real VMEM footprint."""
    sub = max(8, 32 // max(1, itemsize))      # native sublane multiple: 8 f32, 16 bf16, 32 int8
    pad_b = -(-batch // sub) * sub            # batch axis is padded to `sub` rows in VMEM
    bytes_per_flat_elem = (4 * pad_b + 2 * sub) * itemsize  # 2 bufs each: x-in, out, pe
    budget = min(int(0.6 * vmem_cap), 48 * 1024 * 1024)     # generation-aware headroom
    tf = budget // bytes_per_flat_elem
    if tf >= _GRANULE:
        tf = (tf // _GRANULE) * _GRANULE
    else:
        tf = max(_LANE, (tf // _LANE) * _LANE)
    if tf >= flat_len and flat_len >= 2 * _GRANULE:
        # Whole problem fits one block but is big enough to split -> >=2 grid programs so both
        # v7x TensorCores get work (one extra ~0.35us step, harmless on 1-TC v5e/v6e).
        half = -(-flat_len // 2)
        tf = -(-half // _GRANULE) * _GRANULE
    return tf


def positional_encoding_forward(x, pe_table, *, flat_tile=None, donate_x=False):
    """x: (B, S, D); pe_table: (max_len, D), pre-cast at init. Returns x + pe_table[None, :S, :]."""
    B, S, D = x.shape
    max_len, d_model = pe_table.shape
    if d_model != D:
        raise ValueError(f"d_model mismatch: x has {D}, pe_table has {d_model}")
    if S > max_len:
        raise ValueError(f"sequence length {S} exceeds max_len {max_len}")

    flat_len = S * D
    itemsize = jnp.dtype(x.dtype).itemsize
    vmem_cap = _vmem_capacity_bytes()

    if flat_tile is not None:
        tf = max(_LANE, (int(flat_tile) // _LANE) * _LANE)
    else:
        tf = _choose_flat_tile(flat_len, B, itemsize, vmem_cap)

    # Lane-dense flattened views: row-major reshapes are pure layout plumbing (free under jit).
    x_flat = x.reshape(B, flat_len)

    if tf >= flat_len:
        # Single block covering everything -> full-extent blocks.
        tf = flat_len
        num_tiles = 1
        if flat_len % _LANE == 0:
            pe_op = pe_table.reshape(1, max_len * D)          # no slice/cast copy
        else:
            # Non-lane-aligned flat length: PE block must be full-extent too, so take the
            # exact S rows (tiny copy; only happens for flat_len < 2*_GRANULE / odd d_model).
            pe_op = pe_table[:S, :].reshape(1, flat_len)
    else:
        num_tiles = pl.cdiv(flat_len, tf)
        # Full flattened PE table, no per-call slice: the masked tail block of x/out pairs with
        # valid PE rows for positions > S, which are read but never written back (NOT an OOB;
        # Pallas clamps input DMAs to the array bounds anyway).
        pe_op = pe_table.reshape(1, max_len * D)

    # Scoped-VMEM limit: account for sublane padding of the small batch axis, keep headroom
    # below physical VMEM (64 MiB/TC on v7x, 128 MiB on v5e/v6e).
    sub = max(8, 32 // max(1, itemsize))
    pad_b = -(-B // sub) * sub
    working_set = (4 * pad_b + 2 * sub) * tf * itemsize
    vmem_limit = int(min(max(32 * 1024 * 1024, working_set + (4 << 20)),
                         max(32 * 1024 * 1024, int(0.85 * vmem_cap))))

    out_flat = pl.pallas_call(
        _add_pe_kernel,
        out_shape=jax.ShapeDtypeStruct((B, flat_len), x.dtype),
        grid_spec=pltpu.PrefetchScalarGridSpec(
            num_scalar_prefetch=0,
            grid=(num_tiles,),
            in_specs=[
                pl.BlockSpec((B, tf), lambda f: (0, f)),   # x: batch folded into the block
                pl.BlockSpec((1, tf), lambda f: (0, f)),   # pe: one row per flat tile
            ],
            out_specs=pl.BlockSpec((B, tf), lambda f: (0, f)),
        ),
        compiler_params=pltpu.CompilerParams(
            dimension_semantics=("parallel",),
            vmem_limit_bytes=vmem_limit,
        ),
        # Optional in-place add when the caller can donate x (saves a B*S*D HBM allocation).
        input_output_aliases={0: 0} if donate_x else {},
    )(x_flat, pe_op)

    # TODO(synk): for B<=2 inference, drop the PE input entirely and generate the sin/cos tile
    # in-kernel from broadcasted_iota (removes one HBM stream; trig hides under the DMA path).
    return out_flat.reshape(B, S, D)


if __name__ == "__main__":
    # Test 1: the module's nominal small shapes (batch=2, seq=8, d_model=32).
    B, S, D = 2, 8, 32
    pe = _build_pe(D, max_len=64)  # built & dtype-cast ONCE at init (no per-call slice/cast)
    x = jax.random.normal(jax.random.PRNGKey(0), (B, S, D), dtype=jnp.float32)
    out = jax.block_until_ready(positional_encoding_forward(x, pe))
    ref = x + pe[None, :S, :]
    assert out.shape == (B, S, D)
    np.testing.assert_allclose(np.asarray(out), np.asarray(ref), rtol=1e-6, atol=1e-6)

    # Test 2: multi-tile grid over the lane-dense flattened axis (forced small tile).
    B2, S2, D2 = 2, 24, 128
    pe2 = _build_pe(D2, max_len=64)
    x2 = jax.random.normal(jax.random.PRNGKey(0), (B2, S2, D2), dtype=jnp.float32)
    out2 = jax.block_until_ready(positional_encoding_forward(x2, pe2, flat_tile=1024))
    np.testing.assert_allclose(np.asarray(out2), np.asarray(x2 + pe2[None, :S2, :]),
                               rtol=1e-6, atol=1e-6)

    # Test 3: flat length not divisible by the tile -> masked tail block whose PE reads valid
    # rows beyond S that are never written back.
    B3, S3, D3 = 2, 20, 32
    pe3 = _build_pe(D3, max_len=64)
    x3 = jax.random.normal(jax.random.PRNGKey(0), (B3, S3, D3), dtype=jnp.float32)
    out3 = jax.block_until_ready(positional_encoding_forward(x3, pe3, flat_tile=256))
    np.testing.assert_allclose(np.asarray(out3), np.asarray(x3 + pe3[None, :S3, :]),
                               rtol=1e-6, atol=1e-6)

    # Test 4: odd d_model / non-lane-aligned flat length -> single full-extent-block path.
    B4, S4, D4 = 2, 7, 33
    pe4 = _build_pe(D4, max_len=64)
    x4 = jax.random.normal(jax.random.PRNGKey(0), (B4, S4, D4), dtype=jnp.float32)
    out4 = jax.block_until_ready(positional_encoding_forward(x4, pe4))
    np.testing.assert_allclose(np.asarray(out4), np.asarray(x4 + pe4[None, :S4, :]),
                               rtol=1e-6, atol=1e-6)

    print("KERNEL_OK")
</pallas_src>

<mosaic_0001>
module attributes {stable_mosaic.version = 11 : i64} {
  func.func @_add_pe_kernel(%arg0: i32, %arg1: memref<2x256xf32, #tpu.memory_space<vmem>>, %arg2: memref<1x256xf32, #tpu.memory_space<vmem>>, %arg3: memref<2x256xf32, #tpu.memory_space<vmem>>) attributes {dimension_semantics = [#tpu.dimension_semantics<parallel>], iteration_bounds = array<i64: 1>, scalar_prefetch = 0 : i64, scratch_operands = 0 : i64, tpu.core_type = #tpu.core_type<tc>, window_params = [{transform_indices = @transform_0, window_bounds = array<i64: 2, 256>}, {transform_indices = @transform_1, window_bounds = array<i64: 1, 256>}, {transform_indices = @transform_2, window_bounds = array<i64: 2, 256>}]} {
    %c0 = arith.constant 0 : index
    %c0_0 = arith.constant 0 : index
    %0 = vector.load %arg1[%c0, %c0_0] : memref<2x256xf32, #tpu.memory_space<vmem>>, vector<2x256xf32>
    %c0_1 = arith.constant 0 : index
    %c0_2 = arith.constant 0 : index
    %1 = vector.load %arg2[%c0_1, %c0_2] : memref<1x256xf32, #tpu.memory_space<vmem>>, vector<1x256xf32>
    %2 = vector.broadcast %1 : vector<1x256xf32> to vector<2x256xf32>
    %3 = arith.addf %0, %2 : vector<2x256xf32>
    %c0_3 = arith.constant 0 : index
    %c0_4 = arith.constant 0 : index
    %4 = vector.load %arg3[%c0_3, %c0_4] : memref<2x256xf32, #tpu.memory_space<vmem>>, vector<2x256xf32>
    tpu.vector_store %arg3[%c0_3, %c0_4], %3 {strides = array<i32>} : memref<2x256xf32, #tpu.memory_space<vmem>>, vector<2x256xf32>,
    return
  }
  func.func @transform_0(%arg0: i32) -> (i32, i32) {
    %c0_i32 = arith.constant 0 : i32
    %c0_i32_0 = arith.constant 0 : i32
    return %c0_i32, %arg0 : i32, i32
  }
  func.func @transform_1(%arg0: i32) -> (i32, i32) {
    %c0_i32 = arith.constant 0 : i32
    %c0_i32_0 = arith.constant 0 : i32
    return %c0_i32, %arg0 : i32, i32
  }
  func.func @transform_2(%arg0: i32) -> (i32, i32) {
    %c0_i32 = arith.constant 0 : i32
    %c0_i32_0 = arith.constant 0 : i32
    return %c0_i32, %arg0 : i32, i32
  }
}

</mosaic_0001>

<llo_original>
// kernel: tpu_custom_call.1
$region0: #{tpu_custom_call.1}
  #allocation0 [shape = 'u32[]', space=smem, size = 0x4, offset = 0x4, fixed_abs, tag = 'smem constant byte address 0x4 - core index']
  #allocation1 [shape = 'u32[72,128]{1,0:T(1,128)}', space=vmem, size = 0x9000, scoped, tag = 'internal scratch']
  %s0 = inlined_call_operand.hbm [shape: f32[2,256], index: 0, kind: input, shape index: {}]
  %s1 = inlined_call_operand.hbm [shape: f32[1,2048], index: 1, kind: input, shape index: {}]
  %s2 = inlined_call_operand.hbm [shape: f32[2,256], index: 2, kind: output, shape index: {}]
  %s3 = sld [smem:[#allocation0]]
  $region26: #{tpu_custom_call.1} parent=0
    _
  %s5 = ssub.s32 1, %s3
  %s6 = scalar_select 0, %s5, %s3
  $region1: #{tpu_custom_call.1} parent=0
    #allocation2 [shape = 'u8[2048]{0}', space=vmem, size = 0x800, scoped, tag = 'input window, operand 0, single buffered']
    #allocation3 [shape = 's32[1]{0}', space=sflag, size = 0x4, scoped, tag = 'scoped memory for tpu_custom_call.1']
    #allocation4 [shape = 's32[1]{0}', space=sflag, size = 0x4, scoped, tag = 'scoped memory for tpu_custom_call.1']
    #allocation5 [shape = 'u8[1024]{0}', space=vmem, size = 0x400, scoped, tag = 'input window, operand 1, single buffered']
    #allocation6 [shape = 's32[1]{0}', space=sflag, size = 0x4, scoped, tag = 'scoped memory for tpu_custom_call.1']
    #allocation7 [shape = 'u8[2048]{0}', space=vmem, size = 0x800, scoped, tag = 'output window, operand 0, single buffered']
    %7 = vsyncpa [#allocation3], 0
    %8 = vsyncpa [#allocation6], 0
    %9 = vsyncpa [#allocation4], 0
    // Predicated region
    $region2: #{tpu_custom_call.1} parent=1 // pred_check
      _
    $region3: #{tpu_custom_call.1} parent=1 // pred_check_branch
      %11 = sbr.rel (0) target = $region5
    $region4: #{tpu_custom_call.1} parent=1 // pred_region
      %13 = vsyncadd [#allocation3], 0
      %s15 = sshll.u32 %s0, 4
      %s16 = int_to_ptr.hbm [resolvable:$true] %s15
      %s17 = sshll.u32 [#allocation2], 4
      %s18 = int_to_ptr.vmem [resolvable:$true] %s17
      %20 = dma.hbm_to_vmem [thread:$0]  %s16, 64, %s18, [#allocation3]
    $region5: #{tpu_custom_call.1} parent=1 // pred_fallthru
      _
    // Predicated region
    $region6: #{tpu_custom_call.1} parent=1 // pred_check
      _
    $region7: #{tpu_custom_call.1} parent=1 // pred_check_branch
      %22 = sbr.rel (0) target = $region9
    $region8: #{tpu_custom_call.1} parent=1 // pred_region
      %24 = vsyncadd [#allocation6], 0
      %s26 = sshll.u32 %s1, 4
      %s27 = int_to_ptr.hbm [resolvable:$true] %s26
      %s28 = sshll.u32 [#allocation5], 4
      %s29 = int_to_ptr.vmem [resolvable:$true] %s28
      %31 = dma.hbm_to_vmem [thread:$0]  %s27, 32, %s29, [#allocation6]
    $region9: #{tpu_custom_call.1} parent=1 // pred_fallthru
      _
    // Predicated region
    $region10: #{tpu_custom_call.1} parent=1 // pred_check
      _
    $region11: #{tpu_custom_call.1} parent=1 // pred_check_branch
      %33 = sbr.rel (0) target = $region13
    $region12: #{tpu_custom_call.1} parent=1 // pred_region
      %35 = dma.done [#allocation3], 64
    $region13: #{tpu_custom_call.1} parent=1 // pred_fallthru
      _
    // Predicated region
    $region14: #{tpu_custom_call.1} parent=1 // pred_check
      _
    $region15: #{tpu_custom_call.1} parent=1 // pred_check_branch
      %37 = sbr.rel (0) target = $region17
    $region16: #{tpu_custom_call.1} parent=1 // pred_region
      %39 = dma.done [#allocation6], 32
    $region17: #{tpu_custom_call.1} parent=1 // pred_fallthru
      _
    %v40 = vld [vmem:[#allocation2] sm:$0xf]
    %v41 = vld [vmem:[#allocation5] sm:$0x3]
    %v43 = vperm.slane %v41, 0
    %v44 = vperm.slane %v41, 1
    %v45 = vrot.slane %v44, 6
    %vm46 = vcmask 1041408
    %v47 = vsel %vm46, %v43, %v45
    %v49 = vadd.f32 %v40, %v47
    %50 = vst [vmem:[#allocation7] sm:$0xf] %v49
    // Predicated region
    $region18: #{tpu_custom_call.1} parent=1 // pred_check
      _
    $region19: #{tpu_custom_call.1} parent=1 // pred_check_branch
      %52 = sbr.rel (0) target = $region21
    $region20: #{tpu_custom_call.1} parent=1 // pred_region
      %54 = vsyncadd [#allocation4], 0
      %s56 = sshll.u32 [#allocation7], 4
      %s57 = int_to_ptr.vmem [resolvable:$true] %s56
      %s58 = sshll.u32 %s2, 4
      %s59 = int_to_ptr.hbm [resolvable:$true] %s58
      %61 = dma.vmem_to_hbm [thread:$0]  %s57, 64, %s59, [#allocation4]
    $region21: #{tpu_custom_call.1} parent=1 // pred_fallthru
      _
    // Predicated region
    $region22: #{tpu_custom_call.1} parent=1 // pred_check
      _
    $region23: #{tpu_custom_call.1} parent=1 // pred_check_branch
      %63 = sbr.rel (0) target = $region25
    $region24: #{tpu_custom_call.1} parent=1 // pred_region
      %65 = dma.done [#allocation4], 64
    $region25: #{tpu_custom_call.1} parent=1 // pred_fallthru
      _
    %66 = vsyncpa [#allocation3], 1
    %67 = vsyncpa [#allocation6], 1
    %68 = vsyncpa [#allocation4], 1

</llo_original>
